<compile_context>
chip_gen: v6e
topology: v6e:2x2x1
jax: 0.10.0
libtpu: 0.0.40
codegen_flags: <defaults>
</compile_context>

<pallas_src>
import numpy as np

import jax
import jax.numpy as jnp
from jax.experimental import pallas as pl
from jax.experimental.pallas import tpu as pltpu

_LANE = 128
_SUBLANE = 8
_VMEM_LIMIT_BYTES = 32 * 1024 * 1024  # safe on v5e/v6e/v7x scoped-VMEM budgets


def _round_up(x, m):
    return (x + m - 1) // m * m


def _conv_gate_stats_kernel(w_ref, x_ref, y_ref, sum_ref, ssq_ref):
    """Pass 1: y = (W*zeta) @ x_col^T for one M-tile + per-channel sum / sumsq.

    w_ref:   (C_out_p, KC_p)    bf16/f32  (zeta gate already folded in)
    x_ref:   (KC_p, tile_m)     bf16/f32  (im2col, transposed: lanes carry M)
    y_ref:   (C_out_p, tile_m)  f32       gated conv output tile
    sum_ref: (C_out_p, 1)       f32       grid-resident accumulator
    ssq_ref: (C_out_p, 1)       f32       grid-resident accumulator
    """
    @pl.when(pl.program_id(0) == 0)
    def _init():
        sum_ref[...] = jnp.zeros_like(sum_ref)
        ssq_ref[...] = jnp.zeros_like(ssq_ref)

    y = jnp.dot(w_ref[...], x_ref[...], preferred_element_type=jnp.float32)
    y_ref[...] = y
    sum_ref[...] += jnp.sum(y, axis=1, keepdims=True)
    ssq_ref[...] += jnp.sum(y * y, axis=1, keepdims=True)


def _bn_apply_kernel(scale_ref, bias_ref, y_ref, o_ref):
    """Pass 2: one FMA/elem: out = y*(gamma*inv_std) + (beta - mean*gamma*inv_std)."""
    o_ref[...] = y_ref[...] * scale_ref[...] + bias_ref[...]


def sparse_conv_norm_forward(x, weight, zeta, gamma, beta, *, stride=1, eps=1e-5,
                             tile_m=1024, compute_dtype=jnp.bfloat16):
    """x: (N, C_in, H, W) f32 NCHW. weight: (C_out, C_in, K, K) OIHW.
    zeta: (1, C_out, 1, 1). gamma/beta: (C_out,). Returns (N, C_out, H_out, W_out) f32."""
    N, C_in, H, W = x.shape
    C_out, _, K, _ = weight.shape
    pad = (K - 1) // 2                      # module default padding
    H_out = (H + 2 * pad - K) // stride + 1
    W_out = (W + 2 * pad - K) // stride + 1
    M = N * H_out * W_out
    KC = K * K * C_in

    # Padded / tiled sizes (the lane axis carries M; sublanes carry channels).
    tile_m = _round_up(min(tile_m, _round_up(M, _LANE)), _LANE)
    M_p = _round_up(M, tile_m)
    KC_p = _round_up(KC, _LANE)
    C_out_p = _round_up(C_out, _SUBLANE)
    n_tiles = M_p // tile_m

    f32 = jnp.float32
    itemsize = np.dtype(compute_dtype).itemsize

    # ---- host glue: im2col, transposed to (KC, M), zero-padded, cast ----
    x_nhwc = jnp.transpose(x, (0, 2, 3, 1))
    x_hw_pad = jnp.pad(x_nhwc, ((0, 0), (pad, pad), (pad, pad), (0, 0)))
    taps = []
    for ki in range(K):
        for kj in range(K):
            taps.append(
                x_hw_pad[:, ki:ki + stride * (H_out - 1) + 1:stride,
                         kj:kj + stride * (W_out - 1) + 1:stride, :])
    # rows = flattened (n, h, w); cols = (ki, kj, c_in)
    xcol = jnp.stack(taps, axis=3).reshape(M, KC)
    xcol_t = jnp.zeros((KC_p, M_p), compute_dtype)
    xcol_t = xcol_t.at[:KC, :M].set(xcol.T.astype(compute_dtype))

    # weight (C_out, C_in, K, K) -> (KC, C_out); fold the zeta gate (a pure
    # per-output-channel scale: (X@W)*zeta == X@(W*zeta)).
    w_col = jnp.transpose(weight, (2, 3, 1, 0)).reshape(KC, C_out)
    w_col = w_col * zeta.reshape(1, C_out).astype(f32)
    w_t = jnp.zeros((C_out_p, KC_p), compute_dtype)
    w_t = w_t.at[:C_out, :KC].set(w_col.T.astype(compute_dtype))

    # ---- pass 1: conv (MXU) + gated y tiles + per-channel sum / sumsq ----
    cost1 = pl.CostEstimate(
        flops=2 * M_p * KC_p * C_out_p,
        transcendentals=0,
        bytes_accessed=(KC_p * M_p + C_out_p * KC_p) * itemsize
                       + (M_p * C_out_p + 2 * C_out_p) * 4)
    y_t, ch_sum, ch_ssq = pl.pallas_call(
        _conv_gate_stats_kernel,
        out_shape=(jax.ShapeDtypeStruct((C_out_p, M_p), f32),
                   jax.ShapeDtypeStruct((C_out_p, 1), f32),
                   jax.ShapeDtypeStruct((C_out_p, 1), f32)),
        grid=(n_tiles,),
        in_specs=[pl.BlockSpec((C_out_p, KC_p), lambda j: (0, 0)),
                  pl.BlockSpec((KC_p, tile_m), lambda j: (0, j))],
        out_specs=(pl.BlockSpec((C_out_p, tile_m), lambda j: (0, j)),
                   pl.BlockSpec((C_out_p, 1), lambda j: (0, 0)),
                   pl.BlockSpec((C_out_p, 1), lambda j: (0, 0))),
        compiler_params=pltpu.CompilerParams(
            dimension_semantics=("arbitrary",),   # stats accumulate across M-tiles
            vmem_limit_bytes=_VMEM_LIMIT_BYTES),
        cost_estimate=cost1,
    )(w_t, xcol_t)

    # ---- tiny host glue: BN training-mode stats -> one scale/bias per channel ----
    mean = ch_sum[:, 0] / M                   # divide by the real (unpadded) M
    var = jnp.maximum(ch_ssq[:, 0] / M - mean * mean, 0.0)
    gamma_p = jnp.zeros((C_out_p,), f32).at[:C_out].set(gamma.astype(f32))
    beta_p = jnp.zeros((C_out_p,), f32).at[:C_out].set(beta.astype(f32))
    scale = gamma_p * jax.lax.rsqrt(var + eps)
    bias = beta_p - mean * scale

    # ---- pass 2: lane-dense elementwise normalize, "parallel" over M-tiles ----
    cost2 = pl.CostEstimate(
        flops=2 * M_p * C_out_p,
        transcendentals=0,
        bytes_accessed=2 * M_p * C_out_p * 4 + 2 * C_out_p * 4)
    out_t = pl.pallas_call(
        _bn_apply_kernel,
        out_shape=jax.ShapeDtypeStruct((C_out_p, M_p), f32),
        grid=(n_tiles,),
        in_specs=[pl.BlockSpec((C_out_p, 1), lambda j: (0, 0)),
                  pl.BlockSpec((C_out_p, 1), lambda j: (0, 0)),
                  pl.BlockSpec((C_out_p, tile_m), lambda j: (0, j))],
        out_specs=pl.BlockSpec((C_out_p, tile_m), lambda j: (0, j)),
        compiler_params=pltpu.CompilerParams(
            dimension_semantics=("parallel",),
            vmem_limit_bytes=_VMEM_LIMIT_BYTES),
        cost_estimate=cost2,
    )(scale.reshape(C_out_p, 1), bias.reshape(C_out_p, 1), y_t)

    # ---- host glue: back to NCHW, dropping channel / M padding ----
    out = out_t[:C_out, :M].reshape(C_out, N, H_out, W_out)
    return jnp.transpose(out, (1, 0, 2, 3))


def _reference_forward(x, weight, zeta, gamma, beta, *, stride=1, eps=1e-5,
                       conv_dtype=jnp.float32):
    """Pure-JAX reference matching the PyTorch module (conv2d no-bias, zeta gate,
    BatchNorm2d training-mode forward, Identity act). conv_dtype selects the conv
    operand precision for dtype-matched validation."""
    K = weight.shape[-1]
    pad = (K - 1) // 2
    w = (weight * zeta.reshape(-1, 1, 1, 1)).astype(conv_dtype)   # gate == per-channel scale
    y = jax.lax.conv_general_dilated(
        x.astype(conv_dtype), w, (stride, stride), [(pad, pad), (pad, pad)],
        dimension_numbers=("NCHW", "OIHW", "NCHW"),
        preferred_element_type=jnp.float32)
    mean = jnp.mean(y, axis=(0, 2, 3), keepdims=True)
    var = jnp.mean((y - mean) ** 2, axis=(0, 2, 3), keepdims=True)
    yhat = (y - mean) * jax.lax.rsqrt(var + eps)
    return yhat * gamma.reshape(1, -1, 1, 1) + beta.reshape(1, -1, 1, 1)


if __name__ == "__main__":
    # Module config: ch_in=4, ch_out=8, kernel_size=3, stride=1, padding=None -> 1,
    # bias=False, norm_layer='bn', act=None.
    N, C_in, C_out, H, W, K, stride = 2, 4, 8, 16, 16, 3, 1

    key = jax.random.PRNGKey(0)
    kx, kw, kz = jax.random.split(key, 3)
    x = jax.random.normal(kx, (N, C_in, H, W), dtype=jnp.float32)
    weight = 0.1 * jax.random.normal(kw, (C_out, C_in, K, K), dtype=jnp.float32)
    # zeta init is ones in the module; use a non-trivial gate to exercise the path.
    zeta = jax.random.uniform(kz, (1, C_out, 1, 1), dtype=jnp.float32,
                              minval=0.5, maxval=1.5)
    gamma = jnp.ones((C_out,), dtype=jnp.float32)   # BatchNorm2d default weight
    beta = jnp.zeros((C_out,), dtype=jnp.float32)   # BatchNorm2d default bias

    # Small tile so the test exercises multi-tile stats accumulation:
    # M = 2*16*16 = 512 -> 4 grid steps of 128 lanes each.
    out = sparse_conv_norm_forward(x, weight, zeta, gamma, beta,
                                   stride=stride, tile_m=128)
    out = jax.block_until_ready(out)
    assert out.shape == (N, C_out, H, W), out.shape

    # Dtype-matched reference (bf16 conv operands, f32 accumulation): tight check on
    # the kernel structure (tiling, stats accumulation, layout plumbing).
    ref_bf16 = jax.block_until_ready(
        _reference_forward(x, weight, zeta, gamma, beta, stride=stride,
                           conv_dtype=jnp.bfloat16))
    assert jnp.allclose(out, ref_bf16, atol=2e-3, rtol=2e-3), (
        float(jnp.max(jnp.abs(out - ref_bf16))))

    # Full-f32 module semantics: loose check (difference = bf16 MXU operands only).
    ref_f32 = jax.block_until_ready(
        _reference_forward(x, weight, zeta, gamma, beta, stride=stride))
    assert jnp.allclose(out, ref_f32, atol=3e-2, rtol=3e-2), (
        float(jnp.max(jnp.abs(out - ref_f32))))

    print("KERNEL_OK")
</pallas_src>

<mosaic_0001>
module attributes {stable_mosaic.version = 11 : i64} {
  func.func @_conv_gate_stats_kernel(%arg0: i32, %arg1: memref<8x128xbf16, #tpu.memory_space<vmem>>, %arg2: memref<128x128xbf16, #tpu.memory_space<vmem>>, %arg3: memref<8x128xf32, #tpu.memory_space<vmem>>, %arg4: memref<8x1xf32, #tpu.memory_space<vmem>>, %arg5: memref<8x1xf32, #tpu.memory_space<vmem>>) attributes {dimension_semantics = [#tpu.dimension_semantics<arbitrary>], iteration_bounds = array<i64: 4>, scalar_prefetch = 0 : i64, scratch_operands = 0 : i64, tpu.core_type = #tpu.core_type<tc>, window_params = [{pipeline_mode = #tpu.pipeline_mode<synchronous>, transform_indices = @transform_0, window_bounds = array<i64: 8, 128>}, {transform_indices = @transform_1, window_bounds = array<i64: 128, 128>}, {transform_indices = @transform_2, window_bounds = array<i64: 8, 128>}, {pipeline_mode = #tpu.pipeline_mode<synchronous>, transform_indices = @transform_3, window_bounds = array<i64: 8, 1>}, {pipeline_mode = #tpu.pipeline_mode<synchronous>, transform_indices = @transform_4, window_bounds = array<i64: 8, 1>}]} {
    %c0_i32 = arith.constant 0 : i32
    %0 = arith.cmpi eq, %arg0, %c0_i32 : i32
    %1 = arith.extui %0 : i1 to i32
    %c0_i32_0 = arith.constant 0 : i32
    %2 = arith.cmpi ne, %1, %c0_i32_0 : i32
    scf.if %2 {
      %cst_16 = arith.constant 0.000000e+00 : f32
      %18 = vector.broadcast %cst_16 : f32 to vector<8x1xf32>
      %c0_17 = arith.constant 0 : index
      %c0_18 = arith.constant 0 : index
      %19 = vector.load %arg4[%c0_17, %c0_18] : memref<8x1xf32, #tpu.memory_space<vmem>>, vector<8x1xf32>
      tpu.vector_store %arg4[%c0_17, %c0_18], %18 {strides = array<i32>} : memref<8x1xf32, #tpu.memory_space<vmem>>, vector<8x1xf32>,
      %cst_19 = arith.constant 0.000000e+00 : f32
      %20 = vector.broadcast %cst_19 : f32 to vector<8x1xf32>
      %c0_20 = arith.constant 0 : index
      %c0_21 = arith.constant 0 : index
      %21 = vector.load %arg5[%c0_20, %c0_21] : memref<8x1xf32, #tpu.memory_space<vmem>>, vector<8x1xf32>
      tpu.vector_store %arg5[%c0_20, %c0_21], %20 {strides = array<i32>} : memref<8x1xf32, #tpu.memory_space<vmem>>, vector<8x1xf32>,
    } else {
    }
    %c0 = arith.constant 0 : index
    %c0_1 = arith.constant 0 : index
    %3 = vector.load %arg1[%c0, %c0_1] : memref<8x128xbf16, #tpu.memory_space<vmem>>, vector<8x128xbf16>
    %c0_2 = arith.constant 0 : index
    %c0_3 = arith.constant 0 : index
    %4 = vector.load %arg2[%c0_2, %c0_3] : memref<128x128xbf16, #tpu.memory_space<vmem>>, vector<128x128xbf16>
    %cst = arith.constant dense<0.000000e+00> : vector<8x128xf32>
    %5 = tpu.matmul %3, %4, %cst {dimension_numbers = #tpu.dot_dimension_numbers<[1], [0], [0], [1], [0, 0, 1, 1], [], []>} : vector<8x128xbf16>, vector<128x128xbf16>, vector<8x128xf32> -> vector<8x128xf32>
    %c0_4 = arith.constant 0 : index
    %c0_5 = arith.constant 0 : index
    %6 = vector.load %arg3[%c0_4, %c0_5] : memref<8x128xf32, #tpu.memory_space<vmem>>, vector<8x128xf32>
    tpu.vector_store %arg3[%c0_4, %c0_5], %5 {strides = array<i32>} : memref<8x128xf32, #tpu.memory_space<vmem>>, vector<8x128xf32>,
    %c0_6 = arith.constant 0 : index
    %c0_7 = arith.constant 0 : index
    %7 = vector.load %arg4[%c0_6, %c0_7] : memref<8x1xf32, #tpu.memory_space<vmem>>, vector<8x1xf32>
    %cst_8 = arith.constant dense<0.000000e+00> : vector<8xf32>
    %8 = vector.multi_reduction <add>, %5, %cst_8 [1] : vector<8x128xf32> to vector<8xf32>
    %9 = vector.shape_cast %8 : vector<8xf32> to vector<8x1xf32>
    %10 = arith.addf %7, %9 : vector<8x1xf32>
    %c0_9 = arith.constant 0 : index
    %c0_10 = arith.constant 0 : index
    %11 = vector.load %arg4[%c0_9, %c0_10] : memref<8x1xf32, #tpu.memory_space<vmem>>, vector<8x1xf32>
    tpu.vector_store %arg4[%c0_9, %c0_10], %10 {strides = array<i32>} : memref<8x1xf32, #tpu.memory_space<vmem>>, vector<8x1xf32>,
    %c0_11 = arith.constant 0 : index
    %c0_12 = arith.constant 0 : index
    %12 = vector.load %arg5[%c0_11, %c0_12] : memref<8x1xf32, #tpu.memory_space<vmem>>, vector<8x1xf32>
    %13 = arith.mulf %5, %5 : vector<8x128xf32>
    %cst_13 = arith.constant dense<0.000000e+00> : vector<8xf32>
    %14 = vector.multi_reduction <add>, %13, %cst_13 [1] : vector<8x128xf32> to vector<8xf32>
    %15 = vector.shape_cast %14 : vector<8xf32> to vector<8x1xf32>
    %16 = arith.addf %12, %15 : vector<8x1xf32>
    %c0_14 = arith.constant 0 : index
    %c0_15 = arith.constant 0 : index
    %17 = vector.load %arg5[%c0_14, %c0_15] : memref<8x1xf32, #tpu.memory_space<vmem>>, vector<8x1xf32>
    tpu.vector_store %arg5[%c0_14, %c0_15], %16 {strides = array<i32>} : memref<8x1xf32, #tpu.memory_space<vmem>>, vector<8x1xf32>,
    return
  }
  func.func @transform_0(%arg0: i32) -> (i32, i32) {
    %c0_i32 = arith.constant 0 : i32
    %c0_i32_0 = arith.constant 0 : i32
    %c0_i32_1 = arith.constant 0 : i32
    return %c0_i32, %c0_i32_0 : i32, i32
  }
  func.func @transform_1(%arg0: i32) -> (i32, i32) {
    %c0_i32 = arith.constant 0 : i32
    %c0_i32_0 = arith.constant 0 : i32
    return %c0_i32, %arg0 : i32, i32
  }
  func.func @transform_2(%arg0: i32) -> (i32, i32) {
    %c0_i32 = arith.constant 0 : i32
    %c0_i32_0 = arith.constant 0 : i32
    return %c0_i32, %arg0 : i32, i32
  }
  func.func @transform_3(%arg0: i32) -> (i32, i32) {
    %c0_i32 = arith.constant 0 : i32
    %c0_i32_0 = arith.constant 0 : i32
    %c0_i32_1 = arith.constant 0 : i32
    return %c0_i32, %c0_i32_0 : i32, i32
  }
  func.func @transform_4(%arg0: i32) -> (i32, i32) {
    %c0_i32 = arith.constant 0 : i32
    %c0_i32_0 = arith.constant 0 : i32
    %c0_i32_1 = arith.constant 0 : i32
    return %c0_i32, %c0_i32_0 : i32, i32
  }
}

</mosaic_0001>

<llo_original>
// kernel: tpu_custom_call.1
$region0: #{tpu_custom_call.1}
  #allocation0 [shape = 'u32[]', space=smem, size = 0x4, offset = 0x4, fixed_abs, tag = 'smem constant byte address 0x4 - core index']
  #allocation1 [shape = 'u32[144,128]{1,0:T(1,128)}', space=vmem, size = 0x12000, scoped, tag = 'internal scratch']
  %s0 = inlined_call_operand.hbm [shape: bf16[8,128], index: 0, kind: input, shape index: {}]
  %s1 = inlined_call_operand.hbm [shape: bf16[128,512], index: 1, kind: input, shape index: {}]
  %s2 = inlined_call_operand.hbm [shape: f32[8,512], index: 2, kind: output, shape index: {0}]
  %s3 = inlined_call_operand.vmem [shape: f32[8,1], index: 3, kind: output, shape index: {1}]
  %s4 = inlined_call_operand.vmem [shape: f32[8,1], index: 4, kind: output, shape index: {2}]
  %5 = xla_tuple %s2, %s3, %s4
  %s6 = sld [smem:[#allocation0]]
  $region69: #{tpu_custom_call.1} parent=0
    _
  %s8 = ssub.s32 1, %s6
  %s9 = scalar_select 0, %s8, %s6
  $region1: #{tpu_custom_call.1} parent=0
    #allocation2 [shape = 'u8[2048]{0}', space=vmem, size = 0x800, scoped, tag = 'input window, operand 0, single buffered']
    #allocation3 [shape = 's32[2]{0}', space=sflag, size = 0x8, scoped, tag = 'scoped memory for tpu_custom_call.1']
    #allocation4 [shape = 's32[2]{0}', space=sflag, size = 0x8, scoped, tag = 'scoped memory for tpu_custom_call.1']
    #allocation5 [shape = 'u8[65536]{0}', space=vmem, size = 0x10000, scoped, tag = 'input window, operand 1']
    #allocation6 [shape = 's32[2]{0}', space=sflag, size = 0x8, scoped, tag = 'scoped memory for tpu_custom_call.1']
    #allocation7 [shape = 'u8[8192]{0}', space=vmem, size = 0x2000, scoped, tag = 'output window, operand 0']
    %10 = vsyncpa [#allocation3], 0
    %11 = vsyncpa [#allocation6], 0
    %s12 = scalar_lea.sflag [#allocation6], 1
    %13 = vsyncpa %s12, 0
    %14 = vsyncpa [#allocation4], 0
    %s15 = scalar_lea.sflag [#allocation4], 1
    %16 = vsyncpa %s15, 0
    loop: start=0, step=1, limit=6
    $region2: #{tpu_custom_call.1} parent=1 // loop_pre_header
      _
    $region3: #{tpu_custom_call.1} parent=1 // loop_header
      %s18 = sphi 0, %s22
      %p19 = scmp.ge.s32.totalorder %s18, 6
      %s26 = sphi 0, %s26
      %s28 = sphi 0, %s26
      %s29 = sphi 0, %s28
      %s43 = sphi 0, %s29
      %s49 = sphi 0, %s51
      %s52 = sphi 0, %s49
      %s53 = sphi 0, %s52
      %s69 = sphi 0, %s53
      %s75 = sphi 0, %s77
      %s78 = sphi 0, %s75
      %s79 = sphi 0, %s78
      %s95 = sphi 0, %s79
      %s99 = sphi 0, %s99
      %s101 = sphi 0, %s99
      %s102 = sphi 0, %s101
      %s116 = sphi 0, %s102
      %s120 = sphi 0, %s120
      %s122 = sphi 0, %s120
      %s123 = sphi 0, %s122
      %s137 = sphi 0, %s123
    $region4: #{tpu_custom_call.1} parent=1 // loop_header_branch
      %21 = sbr.rel (%p19) target = $region8
    $region5: #{tpu_custom_call.1} parent=1 // loop_body
      %s23 = ssub.s32 %s18, 1
      %s24 = ssub.s32 %s18, 2
      %s25 = sadd.s32 %s18, 1
      %s27 = sadd.s32 %s26, 1
      %p30 = scmp.eq.s32.totalorder %s18, 3
      %p31 = scmp.ne.s32.totalorder %s26, %s28
      %p32 = scmp.eq.s32.totalorder %s18, 0
      %p33 = por %p31, %p32
      %p34 = scmp.ne.s32.totalorder %s26, %s28
      %p35 = scmp.eq.s32.totalorder %s23, 3
      %p36 = por %p34, %p35
      %p37 = scmp.ne.s32.totalorder %s28, %s29
      %p38 = scmp.eq.s32.totalorder %s23, 0
      %p39 = por %p37, %p38
      %p40 = scmp.ne.s32.totalorder %s28, %s29
      %p41 = scmp.eq.s32.totalorder %s24, 3
      %p42 = por %p40, %p41
      %p44 = scmp.ne.s32.totalorder %s29, %s43
      %p45 = scmp.eq.s32.totalorder %s24, 0
      %p46 = por %p44, %p45
      %s47 = ssub.s32 %s18, %s25
      %p48 = scmp.eq.s32.totalorder %s47, 0
      %s50 = sadd.s32 %s49, 1
      %s51 = scalar_select %p48, %s49, %s50
      %p54 = pneg %p48
      %p55 = scmp.eq.s32.totalorder %s18, 3
      %p56 = por %p54, %p55
      %p57 = scmp.ne.s32.totalorder %s49, %s52
      %p58 = scmp.eq.s32.totalorder %s18, 0
      %p59 = por %p57, %p58
      %p60 = scmp.ne.s32.totalorder %s49, %s52
      %p61 = scmp.eq.s32.totalorder %s23, 3
      %p62 = por %p60, %p61
      %p63 = scmp.ne.s32.totalorder %s52, %s53
      %p64 = scmp.eq.s32.totalorder %s23, 0
      %p65 = por %p63, %p64
      %p66 = scmp.ne.s32.totalorder %s52, %s53
      %p67 = scmp.eq.s32.totalorder %s24, 3
      %p68 = por %p66, %p67
      %p70 = scmp.ne.s32.totalorder %s53, %s69
      %p71 = scmp.eq.s32.totalorder %s24, 0
      %p72 = por %p70, %p71
      %s73 = ssub.s32 %s18, %s25
      %p74 = scmp.eq.s32.totalorder %s73, 0
      %s76 = sadd.s32 %s75, 1
      %s77 = scalar_select %p74, %s75, %s76
      %p80 = pneg %p74
      %p81 = scmp.eq.s32.totalorder %s18, 3
      %p82 = por %p80, %p81
      %p83 = scmp.ne.s32.totalorder %s75, %s78
      %p84 = scmp.eq.s32.totalorder %s18, 0
      %p85 = por %p83, %p84
      %p86 = scmp.ne.s32.totalorder %s75, %s78
      %p87 = scmp.eq.s32.totalorder %s23, 3
      %p88 = por %p86, %p87
      %p89 = scmp.ne.s32.totalorder %s78, %s79
      %p90 = scmp.eq.s32.totalorder %s23, 0
      %p91 = por %p89, %p90
      %p92 = scmp.ne.s32.totalorder %s78, %s79
      %p93 = scmp.eq.s32.totalorder %s24, 3
      %p94 = por %p92, %p93
      %p96 = scmp.ne.s32.totalorder %s79, %s95
      %p97 = scmp.eq.s32.totalorder %s24, 0
      %p98 = por %p96, %p97
      %s100 = sadd.s32 %s99, 1
      %p103 = scmp.eq.s32.totalorder %s18, 3
      %p104 = scmp.ne.s32.totalorder %s99, %s101
      %p105 = scmp.eq.s32.totalorder %s18, 0
      %p106 = por %p104, %p105
      %p107 = scmp.ne.s32.totalorder %s99, %s101
      %p108 = scmp.eq.s32.totalorder %s23, 3
      %p109 = por %p107, %p108
      %p110 = scmp.ne.s32.totalorder %s101, %s102
      %p111 = scmp.eq.s32.totalorder %s23, 0
      %p112 = por %p110, %p111
      %p113 = scmp.ne.s32.totalorder %s101, %s102
      %p114 = scmp.eq.s32.totalorder %s24, 3
      %p115 = por %p113, %p114
      %p117 = scmp.ne.s32.totalorder %s102, %s116
      %p118 = scmp.eq.s32.totalorder %s24, 0
      %p119 = por %p117, %p118
      %s121 = sadd.s32 %s120, 1
      %p124 = scmp.eq.s32.totalorder %s18, 3
      %p125 = scmp.ne.s32.totalorder %s120, %s122
      %p126 = scmp.eq.s32.totalorder %s18, 0
      %p127 = por %p125, %p126
      %p128 = scmp.ne.s32.totalorder %s120, %s122
      %p129 = scmp.eq.s32.totalorder %s23, 3
      %p130 = por %p128, %p129
      %p131 = scmp.ne.s32.totalorder %s122, %s123
      %p132 = scmp.eq.s32.totalorder %s23, 0
      %p133 = por %p131, %p132
      %p134 = scmp.ne.s32.totalorder %s122, %s123
      %p135 = scmp.eq.s32.totalorder %s24, 3
      %p136 = por %p134, %p135
      %p138 = scmp.ne.s32.totalorder %s123, %s137
      %p139 = scmp.eq.s32.totalorder %s24, 0
      %p140 = por %p138, %p139
      %p141 = scmp.le.s32.totalorder 1, %s18
      %p142 = scmp.lt.s32.totalorder %s18, 5
      %p143 = pnand %p141, %p142
      %p144 = pneg %p143
      // Predicated region
      $region9: #{tpu_custom_call.1} parent=5 // pred_check
        _
      $region10: #{tpu_custom_call.1} parent=5 // pred_check_branch
        %146 = sbr.rel (%p143) target = $region12
      $region11: #{tpu_custom_call.1} parent=5 // pred_region
        %s147 = ssub.s32 %s18, 1
        // Predicated region
        $region13: #{tpu_custom_call.1} parent=11 // pred_check
          %p148 = pneg %p39
        $region14: #{tpu_custom_call.1} parent=11 // pred_check_branch
          %150 = sbr.rel (%p148) target = $region16
        $region15: #{tpu_custom_call.1} parent=11 // pred_region
          %s152 = ssub.s32 64, 64
          %153 = vsyncadd [#allocation3], %s152
          %s155 = sshll.u32 [#allocation2], 4
          %s156 = int_to_ptr.vmem [resolvable:$true] %s155
          %158 = dma.hbm_to_vmem [thread:$0]  %s0, 64, %s156, [#allocation3]
        $region16: #{tpu_custom_call.1} parent=11 // pred_fallthru
          _
      $region12: #{tpu_custom_call.1} parent=5 // pred_fallthru
        _
      %p159 = scmp.lt.s32.totalorder %s18, 4
      // Predicated region
      $region17: #{tpu_custom_call.1} parent=5 // pred_check
        %p160 = pneg %p159
      $region18: #{tpu_custom_call.1} parent=5 // pred_check_branch
        %162 = sbr.rel (%p160) target = $region20
      $region19: #{tpu_custom_call.1} parent=5 // pred_region
        // Predicated region
        $region21: #{tpu_custom_call.1} parent=19 // pred_check
          %p163 = pneg %p59
        $region22: #{tpu_custom_call.1} parent=19 // pred_check_branch
          %165 = sbr.rel (%p163) target = $region24
        $region23: #{tpu_custom_call.1} parent=19 // pred_region
          %s166 = sand.u32 %s49, 1
          %s167 = scalar_lea.sflag [#allocation6], %s166
          %s168 = sand.u32 %s49, 1
          %s169 = smul.addr %s168, 64
          %s170 = scalar_lea.vmem [#allocation5], %s169
          %s172 = ssub.s32 1024, 1024
          %173 = vsyncadd %s167, %s172
          %s174 = smul.addr %s18, 64
          %s175 = scalar_lea.hbm %s1, %s174
          %s176 = sshll.u32 %s170, 4
          %s177 = int_to_ptr.vmem [resolvable:$true] %s176
          %182 = dma.hbm_to_vmem [thread:$0]  %s175, 1024, %s177, %s167, 256, 64, 4
        $region24: #{tpu_custom_call.1} parent=19 // pred_fallthru
          _
      $region20: #{tpu_custom_call.1} parent=5 // pred_fallthru
        _
      %p183 = scmp.le.s32.totalorder 1, %s18
      %p184 = scmp.lt.s32.totalorder %s18, 5
      %p185 = pnand %p183, %p184
      %p186 = pneg %p185
      // Predicated region
      $region25: #{tpu_custom_call.1} parent=5 // pred_check
        _
      $region26: #{tpu_custom_call.1} parent=5 // pred_check_branch
        %188 = sbr.rel (%p185) target = $region28
      $region27: #{tpu_custom_call.1} parent=5 // pred_region
        %s189 = ssub.s32 %s18, 1
        // Predicated region
        $region29: #{tpu_custom_call.1} parent=27 // pred_check
          %p190 = pneg %p39
        $region30: #{tpu_custom_call.1} parent=27 // pred_check_branch
          %192 = sbr.rel (%p190) target = $region32
        $region31: #{tpu_custom_call.1} parent=27 // pred_region
          %193 = dma.done [#allocation3], 64
        $region32: #{tpu_custom_call.1} parent=27 // pred_fallthru
          _
        %s194 = sand.u32 %s52, 1
        %s195 = scalar_lea.sflag [#allocation6], %s194
        %s196 = sand.u32 %s52, 1
        %s197 = smul.addr %s196, 64
        %s198 = scalar_lea.vmem [#allocation5], %s197
        // Predicated region
        $region33: #{tpu_custom_call.1} parent=27 // pred_check
          %p199 = pneg %p65
        $region34: #{tpu_custom_call.1} parent=27 // pred_check_branch
          %201 = sbr.rel (%p199) target = $region36
        $region35: #{tpu_custom_call.1} parent=27 // pred_region
          %202 = dma.done %s195, 1024
        $region36: #{tpu_custom_call.1} parent=27 // pred_fallthru
          _
        %p203 = pneg %p39
        %p204 = pneg %p36
        %s205 = sand.u32 %s52, 1
        %s206 = scalar_lea.sflag [#allocation6], %s205
        %s207 = sand.u32 %s52, 1
        %s208 = smul.addr %s207, 64
        %s209 = scalar_lea.vmem [#allocation5], %s208
        %p210 = pneg %p65
        %p211 = pneg %p62
        %p212 = pneg %p91
        %p213 = pneg %p88
        %s214 = sand.u32 %s78, 1
        %s215 = scalar_lea.sflag [#allocation4], %s214
        %s216 = sand.u32 %s78, 1
        %s217 = smul.addr %s216, 8
        %s218 = scalar_lea.vmem [#allocation7], %s217
        %p219 = pneg %p112
        %p220 = pneg %p109
        %p221 = pneg %p133
        %p222 = pneg %p130
        %p224 = scmp.eq.s32.totalorder %s23, 0
        // Predicated region
        $region37: #{tpu_custom_call.1} parent=27 // pred_check
          %p225 = pneg %p224
        $region38: #{tpu_custom_call.1} parent=27 // pred_check_branch
          %227 = sbr.rel (%p225) target = $region40
        $region39: #{tpu_custom_call.1} parent=27 // pred_region
          %vm228 = vcmask 7168
          %229 = vst.msk [vmem:[%s3] sm:$0xff] %vm228, 0.0
          %230 = vst.msk [vmem:[%s4] sm:$0xff] %vm228, 0.0
        $region40: #{tpu_custom_call.1} parent=27 // pred_fallthru
          _
        %v231 = vld [vmem:[#allocation2] sm:$0xf]
        %v232 = vld [vmem:[%s198] sm:$0xf]
        %v233 = vld [vmem:[%s198 + $0x4] sm:$0xf]
        %v234 = vld [vmem:[%s198 + $0x8] sm:$0xf]
        %v235 = vld [vmem:[%s198 + $0xc] sm:$0xf]
        %v236 = vld [vmem:[%s198 + $0x10] sm:$0xf]
        %v237 = vld [vmem:[%s198 + $0x14] sm:$0xf]
        %v238 = vld [vmem:[%s198 + $0x18] sm:$0xf]
        %v239 = vld [vmem:[%s198 + $0x1c] sm:$0xf]
        %v240 = vld [vmem:[%s198 + $0x20] sm:$0xf]
        %v241 = vld [vmem:[%s198 + $0x24] sm:$0xf]
        %v242 = vld [vmem:[%s198 + $0x28] sm:$0xf]
        %v243 = vld [vmem:[%s198 + $0x2c] sm:$0xf]
        %v244 = vld [vmem:[%s198 + $0x30] sm:$0xf]
        %v245 = vld [vmem:[%s198 + $0x34] sm:$0xf]
        %v246 = vld [vmem:[%s198 + $0x38] sm:$0xf]
        %v247 = vld [vmem:[%s198 + $0x3c] sm:$0xf]
        %v264 = vunpack.c.l.b16 %v232
        %v265 = vunpack.c.l.b16 %v233
        %v266 = vunpack.c.l.b16 %v234
        %v267 = vunpack.c.l.b16 %v235
        %v268 = vunpack.c.l.b16 %v236
        %v269 = vunpack.c.l.b16 %v237
        %v270 = vunpack.c.l.b16 %v238
        %v271 = vunpack.c.l.b16 %v239
        %v272 = vunpack.c.l.b16 %v240
        %v273 = vunpack.c.l.b16 %v241
        %v274 = vunpack.c.l.b16 %v242
        %v275 = vunpack.c.l.b16 %v243
        %v276 = vunpack.c.l.b16 %v244
        %v277 = vunpack.c.l.b16 %v245
        %v278 = vunpack.c.l.b16 %v246
        %v279 = vunpack.c.l.b16 %v247
        %v280 = vpack.c.b16 %v265, %v264
        %v281 = vpack.c.b16 %v267, %v266
        %v282 = vpack.c.b16 %v269, %v268
        %v283 = vpack.c.b16 %v271, %v270
        %v284 = vpack.c.b16 %v273, %v272
        %v285 = vpack.c.b16 %v275, %v274
        %v286 = vpack.c.b16 %v277, %v276
        %v287 = vpack.c.b16 %v279, %v278
        %296 = vmatprep.subr.bf16.mxu0 0
        %297 = vmatpush1.bf16.msra.mxu0 %v287
        %298 = vmatprep.subr.bf16.mxu0 0
        %299 = vmatpush1.bf16.msra.mxu0 %v286
        %300 = vmatprep.subr.bf16.mxu0 0
        %301 = vmatpush1.bf16.msra.mxu0 %v285
        %302 = vmatprep.subr.bf16.mxu0 0
        %303 = vmatpush1.bf16.msra.mxu0 %v284
        %304 = vmatprep.subr.bf16.mxu0 0
        %305 = vmatpush1.bf16.msra.mxu0 %v283
        %306 = vmatprep.subr.bf16.mxu0 0
        %307 = vmatpush1.bf16.msra.mxu0 %v282
        %308 = vmatprep.subr.bf16.mxu0 0
        %309 = vmatpush1.bf16.msra.mxu0 %v281
        %310 = vmatprep.subr.bf16.mxu0 0
        %311 = vmatpush1.bf16.msra.mxu0 %v280
        %312 = vmatprep.subr.bf16.mxu0 0
        %313 = vmatpush2.bf16.msra.mxu0 0
        %314 = vmatprep.subr.bf16.mxu0 0
        %315 = vmatpush2.bf16.msra.mxu0 0
        %316 = vmatprep.subr.bf16.mxu0 0
        %317 = vmatpush2.bf16.msra.mxu0 0
        %318 = vmatprep.subr.bf16.mxu0 0
        %319 = vmatpush2.bf16.msra.mxu0 0
        %320 = vmatprep.subr.bf16.mxu0 0
        %321 = vmatpush2.bf16.msra.mxu0 0
        %322 = vmatprep.subr.bf16.mxu0 0
        %323 = vmatpush2.bf16.msra.mxu0 0
        %324 = vmatprep.subr.bf16.mxu0 0
        %325 = vmatpush2.bf16.msra.mxu0 0
        %326 = vmatprep.subr.bf16.mxu0 0
        %327 = vmatpush2.bf16.msra.mxu0 0
        %328 = vmatprep.mubr.bf16.mxu0 0
        %329 = vmatmul.mubr.bf16.gmra.mxu0 %v231
        %v330 = vpop.f32.mrf.mxu0
        %v331 = vadd.f32 0.0, %v330
        %v332 = vpop.f32.mrf.mxu0
        %v333 = vpop.f32.mrf.mxu0
        %v334 = vpop.f32.mrf.mxu0
        %335 = vdwg.mxu0
        %336 = vst [vmem:[%s218] sm:$0xff] %v331
        %v337 = vld [vmem:[%s3] sm:$0xff]
        %338 = vadd.xlane.f32.xlu0 %v331
        %v339 = vpop.xlane.xlu0 %338
        %v340 = vadd.f32 %v337, %v339
        %vm341 = vcmask 7168
        %342 = vst.msk [vmem:[%s3] sm:$0xff] %vm341, %v340
        %v343 = vld [vmem:[%s4] sm:$0xff]
        %v344 = vmul.f32 %v331, %v331
        %345 = vadd.xlane.f32.xlu0 %v344
        %v346 = vpop.xlane.xlu0 %345
        %v347 = vadd.f32 %v343, %v346
        %348 = vst.msk [vmem:[%s4] sm:$0xff] %vm341, %v347
        %s349 = sand.u32 %s78, 1
        %s350 = scalar_lea.sflag [#allocation4], %s349
        %s351 = sand.u32 %s78, 1
        %s352 = smul.addr %s351, 8
        %s353 = scalar_lea.vmem [#allocation7], %s352
        // Predicated region
        $region41: #{tpu_custom_call.1} parent=27 // pred_check
          %p354 = pneg %p88
        $region42: #{tpu_custom_call.1} parent=27 // pred_check_branch
          %356 = sbr.rel (%p354) target = $region44
        $region43: #{tpu_custom_call.1} parent=27 // pred_region
          %s358 = ssub.s32 128, 128
          %359 = vsyncadd %s350, %s358
          %s360 = smul.addr %s23, 128
          %s361 = scalar_lea.hbm %s2, %s360
          %s363 = sshll.u32 %s353, 4
          %s364 = int_to_ptr.vmem [resolvable:$true] %s363
          %366 = dma.vmem_to_hbm [thread:$0]  %s364, 128, %s361, %s350
        $region44: #{tpu_custom_call.1} parent=27 // pred_fallthru
          _
        // Predicated region
        $region45: #{tpu_custom_call.1} parent=27 // pred_check
          %p367 = pneg %p109
        $region46: #{tpu_custom_call.1} parent=27 // pred_check_branch
          %369 = sbr.rel (%p367) target = $region48
        $region47: #{tpu_custom_call.1} parent=27 // pred_region
          _
        $region48: #{tpu_custom_call.1} parent=27 // pred_fallthru
          _
        // Predicated region
        $region49: #{tpu_custom_call.1} parent=27 // pred_check
          %p370 = pneg %p130
        $region50: #{tpu_custom_call.1} parent=27 // pred_check_branch
          %372 = sbr.rel (%p370) target = $region52
        $region51: #{tpu_custom_call.1} parent=27 // pred_region
          _
        $region52: #{tpu_custom_call.1} parent=27 // pred_fallthru
          _
        // Predicated region
        $region53: #{tpu_custom_call.1} parent=27 // pred_check
          %p373 = pneg %p109
        $region54: #{tpu_custom_call.1} parent=27 // pred_check_branch
          %375 = sbr.rel (%p373) target = $region56
        $region55: #{tpu_custom_call.1} parent=27 // pred_region
          _
        $region56: #{tpu_custom_call.1} parent=27 // pred_fallthru
          _
        // Predicated region
        $region57: #{tpu_custom_call.1} parent=27 // pred_check
          %p376 = pneg %p130
        $region58: #{tpu_custom_call.1} parent=27 // pred_check_branch
          %378 = sbr.rel (%p376) target = $region60
        $region59: #{tpu_custom_call.1} parent=27 // pred_region
          _
        $region60: #{tpu_custom_call.1} parent=27 // pred_fallthru
          _
      $region28: #{tpu_custom_call.1} parent=5 // pred_fallthru
        _
      %p379 = scmp.le.s32.totalorder 2, %s18
      // Predicated region
      $region61: #{tpu_custom_call.1} parent=5 // pred_check
        %p380 = pneg %p379
      $region62: #{tpu_custom_call.1} parent=5 // pred_check_branch
        %382 = sbr.rel (%p380) target = $region64
      $region63: #{tpu_custom_call.1} parent=5 // pred_region
        %s383 = ssub.s32 %s18, 2
        // Predicated region
        $region65: #{tpu_custom_call.1} parent=63 // pred_check
          %p384 = pneg %p94
        $region66: #{tpu_custom_call.1} parent=63 // pred_check_branch
          %386 = sbr.rel (%p384) target = $region68
        $region67: #{tpu_custom_call.1} parent=63 // pred_region
          %s387 = sand.u32 %s79, 1
          %s388 = scalar_lea.sflag [#allocation4], %s387
          %s389 = sand.u32 %s79, 1
          %s390 = smul.addr %s389, 8
          %s391 = scalar_lea.vmem [#allocation7], %s390
          %392 = dma.done %s388, 128
        $region68: #{tpu_custom_call.1} parent=63 // pred_fallthru
          _
      $region64: #{tpu_custom_call.1} parent=5 // pred_fallthru
        _
    $region6: #{tpu_custom_call.1} parent=1 // loop_footer
      %s22 = sadd.s32 1, %s18
    $region7: #{tpu_custom_call.1} parent=1 // loop_footer_branch
      %17 = sbr.rel target = $region3
    $region8: #{tpu_custom_call.1} parent=1 // loop_exit
      _
    %393 = vsyncpa [#allocation3], 1
    %s394 = scalar_lea.sflag [#allocation3], 1
    %395 = vsyncpa %s394, 1
    %396 = vsyncpa [#allocation6], 1
    %s397 = scalar_lea.sflag [#allocation6], 1
    %398 = vsyncpa %s397, 1
    %399 = vsyncpa [#allocation4], 1
    %s400 = scalar_lea.sflag [#allocation4], 1
    %401 = vsyncpa %s400, 1

</llo_original>
